<compile_context>
chip_gen: v7x
topology: tpu7x:2x2x1
jax: 0.10.0
libtpu: 0.0.40
codegen_flags: <defaults>
</compile_context>

<pallas_src>
import jax
import jax.numpy as jnp
from jax.experimental import pallas as pl
from jax.experimental.pallas import tpu as pltpu


_TARGET_TILE_BYTES = 2 * 1024 * 1024            # ~2 MiB per block (85%+ of HBM roofline)
_PREFERRED_LANE_WIDTHS = (4096, 2048, 1024, 512, 256, 128)


def _identity_kernel(x_ref, o_ref):
    # Pure passthrough of the current VMEM tile.
    o_ref[...] = x_ref[...]


def _lane_dense_2d_shape(shape):
    """Pick a 2-D (rows, cols) view with cols a large multiple of 128 when possible."""
    total = 1
    for d in shape:
        total *= int(d)
    if total > 0 and total % 128 == 0:
        # Prefer a width that also leaves rows a multiple of 8 (full vregs).
        for cand in _PREFERRED_LANE_WIDTHS:
            if total % cand == 0 and (total // cand) % 8 == 0:
                return total // cand, cand
        for cand in _PREFERRED_LANE_WIDTHS:
            if total % cand == 0:
                return total // cand, cand
    # Fallback: keep the original (contiguous) last dim as the lane dim.
    if len(shape) >= 2 and int(shape[-1]) > 0:
        return total // int(shape[-1]), int(shape[-1])
    return 1, max(total, 1)


def _choose_tile_rows(rows, cols, itemsize):
    """Row tile sized by bytes (~2 MiB), multiple of 8, >=2 blocks when possible."""
    if rows <= 8:
        return rows                              # full (sub-8) sublane extent
    bytes_per_row = max(1, cols * itemsize)
    tr = _TARGET_TILE_BYTES // bytes_per_row
    tr = max(8, (tr // 8) * 8)                   # whole multiples of 8 sublanes
    if tr >= rows:
        # Whole array fits in one target-sized tile; still split in two so both
        # v7x TensorCores get work when the row count allows it.
        if rows >= 16:
            tr = ((rows // 2 + 7) // 8) * 8
        else:
            tr = rows
    return min(tr, rows)


def _identity_copy_2d(x2d):
    rows, cols = x2d.shape
    itemsize = jnp.dtype(x2d.dtype).itemsize
    tile_rows = _choose_tile_rows(rows, cols, itemsize)
    nbytes = rows * cols * itemsize
    grid = (pl.cdiv(rows, tile_rows),)
    return pl.pallas_call(
        _identity_kernel,
        out_shape=jax.ShapeDtypeStruct((rows, cols), x2d.dtype),
        grid_spec=pltpu.PrefetchScalarGridSpec(
            num_scalar_prefetch=0,
            grid=grid,
            in_specs=[pl.BlockSpec((tile_rows, cols), lambda i: (i, 0))],
            out_specs=pl.BlockSpec((tile_rows, cols), lambda i: (i, 0)),
        ),
        compiler_params=pltpu.CompilerParams(
            dimension_semantics=("parallel",),
        ),
        cost_estimate=pl.CostEstimate(
            flops=0, transcendentals=0, bytes_accessed=2 * nbytes),
    )(x2d)


@jax.jit
def _identity_copy(x):
    """Materialized identity copy of `x` through the Pallas kernel.

    The reshapes are bitcasts under jit (contiguous row-major), so the only HBM
    traffic is the kernel's single read + single write of `x` — the minimum for
    a copy that must produce a distinct output buffer.
    """
    orig_shape = x.shape
    rows, cols = _lane_dense_2d_shape(orig_shape)
    x2d = jnp.reshape(x, (rows, cols))
    y2d = _identity_copy_2d(x2d)
    return jnp.reshape(y2d, orig_shape)


class DuplicateIdentity:
    """JAX/Pallas port of the PyTorch DuplicateIdentity module.

    forward(x) -> (None, None, x).  By default this is the exact structural
    identity (returns x_in itself, zero HBM traffic — same as the torch module,
    which also returns the same tensor object).  With materialize=True the
    returned tensor is a fresh buffer produced by the Pallas identity-copy
    kernel (useful as a hook-attachment point).
    """

    def __init__(self, n_samples: int = 10, materialize: bool = False):
        # The original module has no parameters; n_samples is unused there too.
        self.n_samples = n_samples
        self.materialize = materialize

    def __call__(self, x_in: jax.Array):
        if not self.materialize or x_in.size == 0:
            return (None, None, x_in)
        return (None, None, _identity_copy(x_in))


if __name__ == "__main__":
    key = jax.random.PRNGKey(0)
    # Small NCHW input consistent with a conv/UNet feature map.
    x = jax.random.normal(key, (2, 4, 16, 16), dtype=jnp.float32)

    # Default (faithful) path: structural identity, zero HBM traffic.
    layer = DuplicateIdentity(n_samples=10)
    none_a, none_b, y_fast = layer(x)
    assert none_a is None and none_b is None
    assert y_fast is x

    # Kernel path: materialized identity copy via the Pallas kernel.
    layer_mat = DuplicateIdentity(n_samples=10, materialize=True)
    out = layer_mat(x)
    assert isinstance(out, tuple) and len(out) == 3
    assert out[0] is None and out[1] is None
    y = jax.block_until_ready(out[2])

    assert y.shape == x.shape and y.dtype == x.dtype
    assert bool(jnp.all(y == x))

    print("KERNEL_OK")
</pallas_src>

<mosaic_0001>
module attributes {stable_mosaic.version = 11 : i64} {
  func.func @_identity_kernel(%arg0: i32, %arg1: memref<8x256xf32, #tpu.memory_space<vmem>>, %arg2: memref<8x256xf32, #tpu.memory_space<vmem>>) attributes {dimension_semantics = [#tpu.dimension_semantics<parallel>], iteration_bounds = array<i64: 1>, scalar_prefetch = 0 : i64, scratch_operands = 0 : i64, tpu.core_type = #tpu.core_type<tc>, window_params = [{transform_indices = @transform_0, window_bounds = array<i64: 8, 256>}, {transform_indices = @transform_1, window_bounds = array<i64: 8, 256>}]} {
    %c0 = arith.constant 0 : index
    %c0_0 = arith.constant 0 : index
    %0 = vector.load %arg1[%c0, %c0_0] : memref<8x256xf32, #tpu.memory_space<vmem>>, vector<8x256xf32>
    %c0_1 = arith.constant 0 : index
    %c0_2 = arith.constant 0 : index
    %1 = vector.load %arg2[%c0_1, %c0_2] : memref<8x256xf32, #tpu.memory_space<vmem>>, vector<8x256xf32>
    tpu.vector_store %arg2[%c0_1, %c0_2], %0 {strides = array<i32>} : memref<8x256xf32, #tpu.memory_space<vmem>>, vector<8x256xf32>,
    return
  }
  func.func @transform_0(%arg0: i32) -> (i32, i32) {
    %c0_i32 = arith.constant 0 : i32
    %c0_i32_0 = arith.constant 0 : i32
    return %arg0, %c0_i32 : i32, i32
  }
  func.func @transform_1(%arg0: i32) -> (i32, i32) {
    %c0_i32 = arith.constant 0 : i32
    %c0_i32_0 = arith.constant 0 : i32
    return %arg0, %c0_i32 : i32, i32
  }
}

</mosaic_0001>

<llo_original>
// kernel: _identity_copy.1
$region0: #{_identity_copy.1}
  #allocation0 [shape = 'u32[]', space=smem, size = 0x4, offset = 0x4, fixed_abs, tag = 'smem constant byte address 0x4 - core index']
  #allocation1 [shape = 'u32[144,128]{1,0:T(1,128)}', space=vmem, size = 0x12000, scoped, tag = 'internal scratch']
  %s0 = inlined_call_operand.vmem [shape: f32[8,256], index: 0, kind: input, shape index: {}]
  %s1 = inlined_call_operand.vmem [shape: f32[8,256], index: 1, kind: output, shape index: {}]
  %s2 = sld [smem:[#allocation0]]
  $region14: #{_identity_copy.1} parent=0
    _
  %s4 = ssub.s32 1, %s2
  %s5 = scalar_select 0, %s4, %s2
  // Predicated region
  $region2: #{_identity_copy.1} parent=0 // pred_check
    _
  $region3: #{_identity_copy.1} parent=0 // pred_check_branch
    %7 = sbr.rel (0) target = $region5
  $region4: #{_identity_copy.1} parent=0 // pred_region
    _
  $region5: #{_identity_copy.1} parent=0 // pred_fallthru
    _
  %v8 = vld [vmem:[%s0] sm:$0xff]
  %v9 = vld [vmem:[%s0 + $0x8] sm:$0xff]
  %10 = vst [vmem:[%s1] sm:$0xff] %v8
  %11 = vst [vmem:[%s1 + $0x8] sm:$0xff] %v9
  // Predicated region
  $region6: #{_identity_copy.1} parent=0 // pred_check
    _
  $region7: #{_identity_copy.1} parent=0 // pred_check_branch
    %13 = sbr.rel (0) target = $region9
  $region8: #{_identity_copy.1} parent=0 // pred_region
    _
  $region9: #{_identity_copy.1} parent=0 // pred_fallthru
    _
  // Predicated region
  $region10: #{_identity_copy.1} parent=0 // pred_check
    _
  $region11: #{_identity_copy.1} parent=0 // pred_check_branch
    %15 = sbr.rel (0) target = $region13
  $region12: #{_identity_copy.1} parent=0 // pred_region
    _
  $region13: #{_identity_copy.1} parent=0 // pred_fallthru
    _

</llo_original>
